<compile_context>
chip_gen: v7x
topology: tpu7x:2x2x1
jax: 0.10.0
libtpu: 0.0.40
codegen_flags: <defaults>
</compile_context>

<pallas_src>
from functools import partial

import jax
import jax.numpy as jnp
from jax.experimental import pallas as pl
from jax.experimental.pallas import tpu as pltpu


def linear_kernel(x_ref, w_ref, b_ref, o_ref):
    # x_ref: (N, F_pad)  w_ref: (F_pad, H_pad)  b_ref: (1, H_pad)
    # o_ref: (N, H_pad)
    # MXU-native orientation: contract x lanes against w sublanes (plain x @ W).
    acc = jnp.dot(x_ref[...], w_ref[...], preferred_element_type=jnp.float32)
    # f32 accumulate + bias add in f32, single cast at the final store
    # (keeps the epilogue cheap on v5e which has no bf16 VPU path).
    o_ref[...] = (acc + b_ref[...]).astype(o_ref.dtype)


def prepare_params(weight, bias, f_pad=256, h_pad=128):
    """One-time parameter prep (call at load time, NOT per forward).

    weight: (H, F) float32  -- PyTorch nn.Linear layout (out_features, in_features)
    bias:   (H,)   float32
    returns (w_pad, b_pad) with shapes (f_pad, h_pad), (1, h_pad).
    """
    H, F = weight.shape
    assert F <= f_pad and H <= h_pad
    w_t = jnp.transpose(weight)                                  # (F, H)
    w_pad = jnp.zeros((f_pad, h_pad), weight.dtype).at[:F, :H].set(w_t)
    b_pad = jnp.zeros((1, h_pad), bias.dtype).at[0, :H].set(bias)
    return w_pad, b_pad


@partial(jax.jit, static_argnames=("hidden",))
def linear_mcc_forward(x_nchw, w_pad, b_pad, hidden):
    """Forward pass of LinearMCC: Flatten (NCHW row-major) + Linear.

    x_nchw: (N, C, 7, 7) float32
    w_pad:  (F_pad, H_pad) float32  -- pre-transposed & padded weight
    b_pad:  (1, H_pad) float32      -- padded bias row
    hidden: true number of output features (static)
    returns (N, hidden) float32
    """
    N = x_nchw.shape[0]
    F = x_nchw.shape[1] * x_nchw.shape[2] * x_nchw.shape[3]
    F_pad, H_pad = w_pad.shape

    # Flatten exactly like nn.Flatten on an NCHW tensor (row-major), then pad
    # the feature axis to a lane-aligned width.  Fuses into this jit.
    x_flat = x_nchw.reshape(N, F)
    x_pad = jnp.pad(x_flat, ((0, 0), (0, F_pad - F)))

    # Tiny problem: no grid, whole arrays resident in VMEM (block == array, so
    # (8,128) tiling constraints don't apply).
    vmem_spec = pl.BlockSpec(memory_space=pltpu.MemorySpace.VMEM)
    out_pad = pl.pallas_call(
        linear_kernel,
        out_shape=jax.ShapeDtypeStruct((N, H_pad), x_nchw.dtype),
        in_specs=[vmem_spec, vmem_spec, vmem_spec],
        out_specs=vmem_spec,
        cost_estimate=pl.CostEstimate(
            flops=2 * N * F_pad * H_pad,
            bytes_accessed=4 * (N * F_pad + F_pad * H_pad + H_pad + N * H_pad),
            transcendentals=0,
        ),
    )(x_pad, w_pad, b_pad)

    # Drop the zero-padded output columns (still inside the jit -> fused).
    return out_pad[:, :hidden]


if __name__ == "__main__":
    # Module config: input_tensor (channels) = 4, hidden_tensor = 32.
    # Forward implies spatial size 7x7 (Linear expects input_tensor * 7 * 7 feats).
    N, C, HW = 2, 4, 7
    hidden = 32
    F = C * HW * HW

    key = jax.random.PRNGKey(0)
    kx, kw, kb = jax.random.split(key, 3)

    x = jax.random.normal(kx, (N, C, HW, HW), dtype=jnp.float32)
    # Deterministic parameter init (uniform, like PyTorch's default Linear init).
    bound = 1.0 / (F ** 0.5)
    weight = jax.random.uniform(kw, (hidden, F), minval=-bound, maxval=bound,
                                dtype=jnp.float32)
    bias = jax.random.uniform(kb, (hidden,), minval=-bound, maxval=bound,
                              dtype=jnp.float32)

    # One-time parameter prep (transpose + pad) outside the hot forward.
    w_pad, b_pad = prepare_params(weight, bias, f_pad=256, h_pad=128)

    out = linear_mcc_forward(x, w_pad, b_pad, hidden)
    jax.block_until_ready(out)

    # Sanity check against plain-JAX reference (PyTorch semantics: x @ W^T + b).
    ref = x.reshape(N, F) @ weight.T + bias
    assert out.shape == (N, hidden)
    assert jnp.allclose(out, ref, atol=1e-5, rtol=1e-5)

    print("KERNEL_OK")
</pallas_src>

<mosaic_0001>
module attributes {stable_mosaic.version = 11 : i64} {
  func.func @linear_kernel(%arg0: memref<2x256xf32, #tpu.memory_space<vmem>>, %arg1: memref<256x128xf32, #tpu.memory_space<vmem>>, %arg2: memref<1x128xf32, #tpu.memory_space<vmem>>, %arg3: memref<2x128xf32, #tpu.memory_space<vmem>>) attributes {dimension_semantics = [], scalar_prefetch = 0 : i64, scratch_operands = 0 : i64, tpu.core_type = #tpu.core_type<tc>} {
    %c0 = arith.constant 0 : index
    %c0_0 = arith.constant 0 : index
    %0 = vector.load %arg0[%c0, %c0_0] : memref<2x256xf32, #tpu.memory_space<vmem>>, vector<2x256xf32>
    %c0_1 = arith.constant 0 : index
    %c0_2 = arith.constant 0 : index
    %1 = vector.load %arg1[%c0_1, %c0_2] : memref<256x128xf32, #tpu.memory_space<vmem>>, vector<256x128xf32>
    %cst = arith.constant dense<0.000000e+00> : vector<2x128xf32>
    %2 = tpu.matmul %0, %1, %cst {dimension_numbers = #tpu.dot_dimension_numbers<[1], [0], [0], [1], [0, 0, 1, 1], [], []>} : vector<2x256xf32>, vector<256x128xf32>, vector<2x128xf32> -> vector<2x128xf32>
    %c0_3 = arith.constant 0 : index
    %c0_4 = arith.constant 0 : index
    %3 = vector.load %arg2[%c0_3, %c0_4] : memref<1x128xf32, #tpu.memory_space<vmem>>, vector<1x128xf32>
    %4 = vector.broadcast %3 : vector<1x128xf32> to vector<2x128xf32>
    %5 = arith.addf %2, %4 : vector<2x128xf32>
    %c0_5 = arith.constant 0 : index
    %c0_6 = arith.constant 0 : index
    %6 = vector.load %arg3[%c0_5, %c0_6] : memref<2x128xf32, #tpu.memory_space<vmem>>, vector<2x128xf32>
    tpu.vector_store %arg3[%c0_5, %c0_6], %5 {strides = array<i32>} : memref<2x128xf32, #tpu.memory_space<vmem>>, vector<2x128xf32>,
    return
  }
}

</mosaic_0001>

<llo_original>
// kernel: linear_mcc_forward.1
$region0: #{linear_mcc_forward.1}
  #allocation0 [shape = 'u32[]', space=smem, size = 0x4, offset = 0x4, fixed_abs, tag = 'smem constant byte address 0x4 - core index']
  #allocation1 [shape = 'u32[144,128]{1,0:T(1,128)}', space=vmem, size = 0x12000, scoped, tag = 'internal scratch']
  %s0 = inlined_call_operand.vmem [shape: f32[2,256], index: 0, kind: input, shape index: {}]
  %s1 = inlined_call_operand.hbm [shape: f32[256,128], index: 1, kind: input, shape index: {}]
  %s2 = inlined_call_operand.vmem [shape: f32[1,128], index: 2, kind: input, shape index: {}]
  %s3 = inlined_call_operand.hbm [shape: f32[2,128], index: 3, kind: output, shape index: {}]
  %s4 = sld [smem:[#allocation0]]
  $region26: #{linear_mcc_forward.1} parent=0
    _
  %s6 = ssub.s32 1, %s4
  %s7 = scalar_select 0, %s6, %s4
  $region1: #{linear_mcc_forward.1} parent=0
    #allocation2 [shape = 'u8[131072]{0}', space=vmem, size = 0x20000, scoped, tag = 'input window, operand 1, single buffered']
    #allocation3 [shape = 's32[1]{0}', space=sflag, size = 0x4, scoped, tag = 'scoped memory for linear_mcc_forward.1']
    #allocation4 [shape = 's32[1]{0}', space=sflag, size = 0x4, scoped, tag = 'scoped memory for linear_mcc_forward.1']
    #allocation5 [shape = 'u8[1024]{0}', space=vmem, size = 0x400, scoped, tag = 'output window, operand 0, single buffered']
    %8 = vsyncpa [#allocation3], 0
    %9 = vsyncpa [#allocation4], 0
    // Predicated region
    $region2: #{linear_mcc_forward.1} parent=1 // pred_check
      _
    $region3: #{linear_mcc_forward.1} parent=1 // pred_check_branch
      %11 = sbr.rel (0) target = $region5
    $region4: #{linear_mcc_forward.1} parent=1 // pred_region
      _
    $region5: #{linear_mcc_forward.1} parent=1 // pred_fallthru
      _
    // Predicated region
    $region6: #{linear_mcc_forward.1} parent=1 // pred_check
      _
    $region7: #{linear_mcc_forward.1} parent=1 // pred_check_branch
      %13 = sbr.rel (0) target = $region9
    $region8: #{linear_mcc_forward.1} parent=1 // pred_region
      %s15 = ssub.s32 4096, 4096
      %16 = vsyncadd [#allocation3], %s15
      %s17 = sshll.u32 [#allocation2], 4
      %s18 = int_to_ptr.vmem [resolvable:$true] %s17
      %23 = dma.hbm_to_vmem [thread:$0]  %s1, 4096, %s18, [#allocation3], 128, 128, 8
    $region9: #{linear_mcc_forward.1} parent=1 // pred_fallthru
      _
    // Predicated region
    $region10: #{linear_mcc_forward.1} parent=1 // pred_check
      _
    $region11: #{linear_mcc_forward.1} parent=1 // pred_check_branch
      %25 = sbr.rel (0) target = $region13
    $region12: #{linear_mcc_forward.1} parent=1 // pred_region
      _
    $region13: #{linear_mcc_forward.1} parent=1 // pred_fallthru
      _
    // Predicated region
    $region14: #{linear_mcc_forward.1} parent=1 // pred_check
      _
    $region15: #{linear_mcc_forward.1} parent=1 // pred_check_branch
      %27 = sbr.rel (0) target = $region17
    $region16: #{linear_mcc_forward.1} parent=1 // pred_region
      %28 = dma.done [#allocation3], 4096
    $region17: #{linear_mcc_forward.1} parent=1 // pred_fallthru
      _
    %v29 = vld [vmem:[%s0] sm:$0xf]
    %v30 = vld [vmem:[#allocation2] sm:$0xff]
    %v31 = vld [vmem:[#allocation2 + $0x8] sm:$0xff]
    %v32 = vld [vmem:[#allocation2 + $0x10] sm:$0xff]
    %v33 = vld [vmem:[#allocation2 + $0x18] sm:$0xff]
    %v34 = vld [vmem:[#allocation2 + $0x20] sm:$0xff]
    %v35 = vld [vmem:[#allocation2 + $0x28] sm:$0xff]
    %v36 = vld [vmem:[#allocation2 + $0x30] sm:$0xff]
    %v37 = vld [vmem:[#allocation2 + $0x38] sm:$0xff]
    %v38 = vld [vmem:[#allocation2 + $0x40] sm:$0xff]
    %v39 = vld [vmem:[#allocation2 + $0x48] sm:$0xff]
    %v40 = vld [vmem:[#allocation2 + $0x50] sm:$0xff]
    %v41 = vld [vmem:[#allocation2 + $0x58] sm:$0xff]
    %v42 = vld [vmem:[#allocation2 + $0x60] sm:$0xff]
    %v43 = vld [vmem:[#allocation2 + $0x68] sm:$0xff]
    %v44 = vld [vmem:[#allocation2 + $0x70] sm:$0xff]
    %v45 = vld [vmem:[#allocation2 + $0x78] sm:$0xff]
    %v46 = vld [vmem:[#allocation2 + $0x80] sm:$0xff]
    %v47 = vld [vmem:[#allocation2 + $0x88] sm:$0xff]
    %v48 = vld [vmem:[#allocation2 + $0x90] sm:$0xff]
    %v49 = vld [vmem:[#allocation2 + $0x98] sm:$0xff]
    %v50 = vld [vmem:[#allocation2 + $0xa0] sm:$0xff]
    %v51 = vld [vmem:[#allocation2 + $0xa8] sm:$0xff]
    %v52 = vld [vmem:[#allocation2 + $0xb0] sm:$0xff]
    %v53 = vld [vmem:[#allocation2 + $0xb8] sm:$0xff]
    %v54 = vld [vmem:[#allocation2 + $0xc0] sm:$0xff]
    %v55 = vld [vmem:[#allocation2 + $0xc8] sm:$0xff]
    %v56 = vld [vmem:[#allocation2 + $0xd0] sm:$0xff]
    %v57 = vld [vmem:[#allocation2 + $0xd8] sm:$0xff]
    %v58 = vld [vmem:[#allocation2 + $0xe0] sm:$0xff]
    %v59 = vld [vmem:[#allocation2 + $0xe8] sm:$0xff]
    %v60 = vld [vmem:[#allocation2 + $0xf0] sm:$0xff]
    %v61 = vld [vmem:[#allocation2 + $0xf8] sm:$0xff]
    %v62 = vld [vmem:[%s2] sm:$0x1]
    %v64 = vlaneseq
    %v65 = vshrl.u32 %v64, 7
    %v66 = vsub.s32 0, %v65
    %v67 = vrot.slane %v62, %v66
    %v71 = vunpack.c.l.s4 1983009808
    %v72 = vunpack.c.0.s8 %v71
    %v73 = vlaneseq
    %v74 = vshrl.u32 %v73, 7
    %v75 = vsub.s32 %v72, %v74
    %v76 = vrot.slane %v29, %v75
    %v77 = vcombine.high %v76, %v76
    %80 = vmatprep.subr.mxu0 0.0
    %81 = vmatpush1.msra.mxu0 %v30
    %82 = vmatprep.subr.mxu0 0.0
    %83 = vmatpush1.msra.mxu0 %v31
    %84 = vmatprep.subr.mxu0 0.0
    %85 = vmatpush1.msra.mxu0 %v32
    %86 = vmatprep.subr.mxu0 0.0
    %87 = vmatpush1.msra.mxu0 %v33
    %88 = vmatprep.subr.mxu0 0.0
    %89 = vmatpush1.msra.mxu0 %v34
    %90 = vmatprep.subr.mxu0 0.0
    %91 = vmatpush1.msra.mxu0 %v35
    %92 = vmatprep.subr.mxu0 0.0
    %93 = vmatpush1.msra.mxu0 %v36
    %94 = vmatprep.subr.mxu0 0.0
    %95 = vmatpush1.msra.mxu0 %v37
    %96 = vmatprep.subr.mxu0 0.0
    %97 = vmatpush1.msra.mxu0 %v38
    %98 = vmatprep.subr.mxu0 0.0
    %99 = vmatpush1.msra.mxu0 %v39
    %100 = vmatprep.subr.mxu0 0.0
    %101 = vmatpush1.msra.mxu0 %v40
    %102 = vmatprep.subr.mxu0 0.0
    %103 = vmatpush1.msra.mxu0 %v41
    %104 = vmatprep.subr.mxu0 0.0
    %105 = vmatpush1.msra.mxu0 %v42
    %106 = vmatprep.subr.mxu0 0.0
    %107 = vmatpush1.msra.mxu0 %v43
    %108 = vmatprep.subr.mxu0 0.0
    %109 = vmatpush1.msra.mxu0 %v44
    %110 = vmatprep.subr.mxu0 0.0
    %111 = vmatpush1.msra.mxu0 %v45
    %112 = vmatprep.subr.mxu0 0.0
    %113 = vmatpush1.msra.mxu0 %v46
    %114 = vmatprep.subr.mxu0 0.0
    %115 = vmatpush1.msra.mxu0 %v47
    %116 = vmatprep.subr.mxu0 0.0
    %117 = vmatpush1.msra.mxu0 %v48
    %118 = vmatprep.subr.mxu0 0.0
    %119 = vmatpush1.msra.mxu0 %v49
    %120 = vmatprep.subr.mxu0 0.0
    %121 = vmatpush1.msra.mxu0 %v50
    %122 = vmatprep.subr.mxu0 0.0
    %123 = vmatpush1.msra.mxu0 %v51
    %124 = vmatprep.subr.mxu0 0.0
    %125 = vmatpush1.msra.mxu0 %v52
    %126 = vmatprep.subr.mxu0 0.0
    %127 = vmatpush1.msra.mxu0 %v53
    %128 = vmatprep.subr.mxu0 0.0
    %129 = vmatpush1.msra.mxu0 %v54
    %130 = vmatprep.subr.mxu0 0.0
    %131 = vmatpush1.msra.mxu0 %v55
    %132 = vmatprep.subr.mxu0 0.0
    %133 = vmatpush1.msra.mxu0 %v56
    %134 = vmatprep.subr.mxu0 0.0
    %135 = vmatpush1.msra.mxu0 %v57
    %136 = vmatprep.subr.mxu0 0.0
    %137 = vmatpush1.msra.mxu0 %v58
    %138 = vmatprep.subr.mxu0 0.0
    %139 = vmatpush1.msra.mxu0 %v59
    %140 = vmatprep.subr.mxu0 0.0
    %141 = vmatpush1.msra.mxu0 %v60
    %142 = vmatprep.subr.mxu0 0.0
    %143 = vmatpush1.msra.mxu0 %v61
    %144 = vmatprep.mubr.f32.mxu0 %v77
    %145 = vmatmul.mubr.f32.gmra.mrb[0].mxu0 %v76
    %v146 = vpop.f32.mrb[0].mxu0
    %v147 = vadd.f32 %v67, %v146
    %v148 = vpop.f32.mrb[0].mxu0
    %149 = vdwg.mxu0
    %150 = vst [vmem:[#allocation5] sm:$0x3] %v147
    // Predicated region
    $region18: #{linear_mcc_forward.1} parent=1 // pred_check
      _
    $region19: #{linear_mcc_forward.1} parent=1 // pred_check_branch
      %152 = sbr.rel (0) target = $region21
    $region20: #{linear_mcc_forward.1} parent=1 // pred_region
      %s154 = ssub.s32 32, 32
      %155 = vsyncadd [#allocation4], %s154
      %s157 = sshll.u32 [#allocation5], 4
      %s158 = int_to_ptr.vmem [resolvable:$true] %s157
      %160 = dma.vmem_to_hbm [thread:$0]  %s158, 32, %s3, [#allocation4]
    $region21: #{linear_mcc_forward.1} parent=1 // pred_fallthru
      _
    // Predicated region
    $region22: #{linear_mcc_forward.1} parent=1 // pred_check
      _
    $region23: #{linear_mcc_forward.1} parent=1 // pred_check_branch
      %162 = sbr.rel (0) target = $region25
    $region24: #{linear_mcc_forward.1} parent=1 // pred_region
      %163 = dma.done [#allocation4], 32
    $region25: #{linear_mcc_forward.1} parent=1 // pred_fallthru
      _
    %164 = vsyncpa [#allocation3], 1
    %165 = vsyncpa [#allocation4], 1

</llo_original>
